<compile_context>
chip_gen: v7x
topology: tpu7x:2x2x1
jax: 0.10.0
libtpu: 0.0.40
codegen_flags: <defaults>
</compile_context>

<pallas_src>
import functools

import jax
import jax.numpy as jnp
from jax import lax
from jax.experimental import pallas as pl
from jax.experimental.pallas import tpu as pltpu


def _layernorm_kernel(x_ref, wb_ref, o_ref, *, inv_hidden, eps, two_pass):
    # x_ref: (tile_rows, hidden) tile in VMEM.
    # wb_ref: (2, hidden) params (row 0 = weight, row 1 = bias), resident
    # across the whole grid (constant index map).
    x = x_ref[...].astype(jnp.float32)

    if two_pass:
        # Reference two-pass variance (numerical A/B path).
        u = jnp.sum(x, axis=-1, keepdims=True) * inv_hidden
        xc = x - u
        var = jnp.sum(xc * xc, axis=-1, keepdims=True) * inv_hidden
    else:
        # Fused single pass: sum and sum-of-squares together, then
        # var = E[x^2] - mean^2 with f32 accumulation (clamped at 0).
        s1 = jnp.sum(x, axis=-1, keepdims=True)
        s2 = jnp.sum(x * x, axis=-1, keepdims=True)
        u = s1 * inv_hidden
        var = jnp.maximum(s2 * inv_hidden - u * u, 0.0)
        xc = x - u

    inv = lax.rsqrt(var + eps)            # eps inside the sqrt (TF/Bert style)
    y = xc * inv

    w = wb_ref[0:1, :].astype(jnp.float32)
    b = wb_ref[1:2, :].astype(jnp.float32)
    o_ref[...] = (w * y + b).astype(o_ref.dtype)


def _chip_profile():
    """Best-effort (vmem_capacity_bytes, two_tensorcores) for the local TPU."""
    vmem_bytes = 128 * 1024 * 1024
    two_tc = False
    try:
        info = pltpu.get_tpu_info()
        cap = getattr(info, "vmem_capacity_bytes", None)
        if cap:
            vmem_bytes = int(cap)
    except Exception:
        pass
    try:
        kind = jax.devices()[0].device_kind.lower()
    except Exception:
        kind = ""
    if "v7" in kind:
        two_tc = True
        vmem_bytes = min(vmem_bytes, 64 * 1024 * 1024)   # 64 MiB per TC on v7x
    return vmem_bytes, two_tc


def _choose_tile_rows(rows, hidden, dtype, tile_budget_bytes, two_tc):
    """Pick a row tile.

    * I/O (double-buffered) tiles are sized with the real input itemsize;
      the f32 in-kernel temporaries (~3 tile-sized arrays) get their own term.
    * Single-TC chips (v5e/v6e): just take the biggest tile (<=1024 rows) that
      fits the budget — a longer grid only adds per-step overhead there.
    * v7x (2 TCs): additionally keep the grid >= ~8 steps so both cores work.
    """
    itemsize = jnp.dtype(dtype).itemsize
    pack = max(8, 32 // max(1, itemsize))            # sublane packing (f32:8, bf16:16)
    hidden_lanes = ((hidden + 127) // 128) * 128     # physical lane footprint in VMEM

    io_row_bytes = hidden_lanes * itemsize           # real dtype for the DMA buffers
    f32_row_bytes = hidden_lanes * 4                 # in-kernel f32 temporaries
    per_row = 2 * io_row_bytes + 2 * io_row_bytes + 3 * f32_row_bytes

    max_rows = max(pack, tile_budget_bytes // per_row)
    tile = min(1024, max_rows)
    tile = max(pack, (tile // pack) * pack)

    if two_tc:
        # Keep the row grid long enough to feed both v7x TensorCores.
        while rows > tile and (rows + tile - 1) // tile < 8 and tile > pack:
            tile = max(pack, (tile // 2 // pack) * pack)

    if tile > rows:
        tile = max(pack, ((rows + pack - 1) // pack) * pack)
    return tile


def bert_layer_norm(x, weight, bias, eps=1e-12, tile_rows=None, two_pass=False,
                    donate_input=False):
    """TF-style layernorm over the last axis: weight * (x-u)/sqrt(var+eps) + bias.

    x: (..., hidden); weight, bias: (hidden,).
    """
    orig_shape = x.shape
    orig_dtype = x.dtype
    hidden = orig_shape[-1]
    rows = 1
    for d in orig_shape[:-1]:
        rows *= int(d)
    rows = max(rows, 1)

    vmem_cap, two_tc = _chip_profile()
    # Scoped-VMEM ceiling we are willing to ask for on this generation.
    vmem_cap_limit = 40 * 1024 * 1024 if two_tc else 64 * 1024 * 1024
    vmem_cap_limit = min(vmem_cap_limit, int(vmem_cap * 0.6) or vmem_cap_limit)

    if tile_rows is None:
        tile_rows = _choose_tile_rows(
            rows, hidden, orig_dtype,
            tile_budget_bytes=int(vmem_cap_limit * 0.75),
            two_tc=two_tc)

    # No padding / slicing: the kernel reads and writes the caller's layout
    # directly (modulo the cheap reshape-to-2D, a bitcast in XLA).
    x2 = x.reshape(rows, hidden)
    wb = jnp.stack([weight, bias], axis=0)           # (2, hidden)

    grid = (pl.cdiv(rows, tile_rows),)

    # Explicit scoped-VMEM request: 2x double-buffered in + 2x out blocks,
    # ~3 f32 temporaries, the small resident (2,H) params, +25% headroom.
    itemsize = jnp.dtype(orig_dtype).itemsize
    hidden_lanes = ((hidden + 127) // 128) * 128
    io_blk = tile_rows * hidden_lanes * itemsize
    f32_blk = tile_rows * hidden_lanes * 4
    wb_blk = 2 * hidden_lanes * jnp.dtype(wb.dtype).itemsize
    needed = 2 * io_blk + 2 * io_blk + 3 * f32_blk + 2 * wb_blk
    vmem_limit = min(vmem_cap_limit, max(16 * 1024 * 1024, int(needed * 1.25)))

    kernel = functools.partial(
        _layernorm_kernel,
        inv_hidden=1.0 / hidden,
        eps=float(eps),
        two_pass=two_pass,
    )

    extra_kwargs = {}
    if donate_input:
        # Caller promises it no longer needs x: reuse its HBM buffer in-place.
        extra_kwargs["input_output_aliases"] = {0: 0}

    out = pl.pallas_call(
        kernel,
        out_shape=jax.ShapeDtypeStruct((rows, hidden), orig_dtype),
        grid_spec=pltpu.PrefetchScalarGridSpec(
            num_scalar_prefetch=0,
            grid=grid,
            in_specs=[
                pl.BlockSpec((tile_rows, hidden), lambda i: (i, 0)),
                pl.BlockSpec((2, hidden), lambda i: (0, 0)),
            ],
            out_specs=pl.BlockSpec((tile_rows, hidden), lambda i: (i, 0)),
        ),
        compiler_params=pltpu.CompilerParams(
            dimension_semantics=("parallel",),
            vmem_limit_bytes=vmem_limit,
        ),
        **extra_kwargs,
    )(x2, wb)

    return out.reshape(orig_shape)


if __name__ == "__main__":
    key = jax.random.PRNGKey(0)
    batch, seq, hidden = 2, 8, 32

    # Deterministic parameter init matching BertLayerNorm.__init__:
    # weight = ones(hidden), bias = zeros(hidden)
    weight = jnp.ones((hidden,), dtype=jnp.float32)
    bias = jnp.zeros((hidden,), dtype=jnp.float32)

    x = jax.random.normal(key, (batch, seq, hidden), dtype=jnp.float32)

    y = bert_layer_norm(x, weight, bias, eps=1e-12)
    y = jax.block_until_ready(y)

    # Reference check in plain JAX (same math as the PyTorch forward).
    u = jnp.mean(x, axis=-1, keepdims=True)
    s = jnp.mean((x - u) ** 2, axis=-1, keepdims=True)
    ref = weight * ((x - u) / jnp.sqrt(s + 1e-12)) + bias
    assert jnp.allclose(y, ref, atol=1e-5, rtol=1e-5), "mismatch vs reference"

    # Also exercise the two-pass (numerical A/B) path once.
    y2 = jax.block_until_ready(bert_layer_norm(x, weight, bias, two_pass=True))
    assert jnp.allclose(y2, ref, atol=1e-5, rtol=1e-5), "two-pass mismatch"

    print("KERNEL_OK")
</pallas_src>

<mosaic_0001>
module attributes {stable_mosaic.version = 11 : i64} {
  func.func @_layernorm_kernel(%arg0: i32, %arg1: memref<16x32xf32, #tpu.memory_space<vmem>>, %arg2: memref<2x32xf32, #tpu.memory_space<vmem>>, %arg3: memref<16x32xf32, #tpu.memory_space<vmem>>) attributes {dimension_semantics = [#tpu.dimension_semantics<parallel>], iteration_bounds = array<i64: 1>, scalar_prefetch = 0 : i64, scratch_operands = 0 : i64, tpu.core_type = #tpu.core_type<tc>, window_params = [{transform_indices = @transform_0, window_bounds = array<i64: 16, 32>}, {pipeline_mode = #tpu.pipeline_mode<synchronous>, transform_indices = @transform_1, window_bounds = array<i64: 2, 32>}, {transform_indices = @transform_2, window_bounds = array<i64: 16, 32>}]} {
    %c0 = arith.constant 0 : index
    %c0_0 = arith.constant 0 : index
    %0 = vector.load %arg1[%c0, %c0_0] : memref<16x32xf32, #tpu.memory_space<vmem>>, vector<16x32xf32>
    %cst = arith.constant dense<0.000000e+00> : vector<16xf32>
    %1 = vector.multi_reduction <add>, %0, %cst [1] : vector<16x32xf32> to vector<16xf32>
    %2 = vector.shape_cast %1 : vector<16xf32> to vector<16x1xf32>
    %3 = arith.mulf %0, %0 : vector<16x32xf32>
    %cst_1 = arith.constant dense<0.000000e+00> : vector<16xf32>
    %4 = vector.multi_reduction <add>, %3, %cst_1 [1] : vector<16x32xf32> to vector<16xf32>
    %5 = vector.shape_cast %4 : vector<16xf32> to vector<16x1xf32>
    %cst_2 = arith.constant 3.125000e-02 : f32
    %6 = vector.broadcast %cst_2 : f32 to vector<16x1xf32>
    %7 = arith.mulf %2, %6 : vector<16x1xf32>
    %cst_3 = arith.constant 3.125000e-02 : f32
    %8 = vector.broadcast %cst_3 : f32 to vector<16x1xf32>
    %9 = arith.mulf %5, %8 : vector<16x1xf32>
    %10 = arith.mulf %7, %7 : vector<16x1xf32>
    %11 = arith.subf %9, %10 : vector<16x1xf32>
    %cst_4 = arith.constant 0.000000e+00 : f32
    %12 = vector.broadcast %cst_4 : f32 to vector<16x1xf32>
    %13 = arith.maximumf %11, %12 : vector<16x1xf32>
    %14 = vector.broadcast %7 : vector<16x1xf32> to vector<16x32xf32>
    %15 = arith.subf %0, %14 : vector<16x32xf32>
    %cst_5 = arith.constant 9.99999996E-13 : f32
    %16 = vector.broadcast %cst_5 : f32 to vector<16x1xf32>
    %17 = arith.addf %13, %16 : vector<16x1xf32>
    %18 = math.rsqrt %17 : vector<16x1xf32>
    %19 = vector.broadcast %18 : vector<16x1xf32> to vector<16x32xf32>
    %20 = arith.mulf %15, %19 : vector<16x32xf32>
    %c0_6 = arith.constant 0 : index
    %c0_7 = arith.constant 0 : index
    %21 = vector.load %arg2[%c0_6, %c0_7] : memref<2x32xf32, #tpu.memory_space<vmem>>, vector<1x32xf32>
    %c1 = arith.constant 1 : index
    %c0_8 = arith.constant 0 : index
    %22 = vector.load %arg2[%c1, %c0_8] : memref<2x32xf32, #tpu.memory_space<vmem>>, vector<1x32xf32>
    %23 = vector.broadcast %21 : vector<1x32xf32> to vector<16x32xf32>
    %24 = arith.mulf %23, %20 : vector<16x32xf32>
    %25 = vector.broadcast %22 : vector<1x32xf32> to vector<16x32xf32>
    %26 = arith.addf %24, %25 : vector<16x32xf32>
    %c0_9 = arith.constant 0 : index
    %c0_10 = arith.constant 0 : index
    %27 = vector.load %arg3[%c0_9, %c0_10] : memref<16x32xf32, #tpu.memory_space<vmem>>, vector<16x32xf32>
    tpu.vector_store %arg3[%c0_9, %c0_10], %26 {strides = array<i32>} : memref<16x32xf32, #tpu.memory_space<vmem>>, vector<16x32xf32>,
    return
  }
  func.func @transform_0(%arg0: i32) -> (i32, i32) {
    %c0_i32 = arith.constant 0 : i32
    %c0_i32_0 = arith.constant 0 : i32
    return %arg0, %c0_i32 : i32, i32
  }
  func.func @transform_1(%arg0: i32) -> (i32, i32) {
    %c0_i32 = arith.constant 0 : i32
    %c0_i32_0 = arith.constant 0 : i32
    %c0_i32_1 = arith.constant 0 : i32
    return %c0_i32, %c0_i32_0 : i32, i32
  }
  func.func @transform_2(%arg0: i32) -> (i32, i32) {
    %c0_i32 = arith.constant 0 : i32
    %c0_i32_0 = arith.constant 0 : i32
    return %arg0, %c0_i32 : i32, i32
  }
}

</mosaic_0001>

<llo_original>
// kernel: tpu_custom_call.1
$region0: #{tpu_custom_call.1}
  #allocation0 [shape = 'u32[]', space=smem, size = 0x4, offset = 0x4, fixed_abs, tag = 'smem constant byte address 0x4 - core index']
  #allocation1 [shape = 'u32[144,128]{1,0:T(1,128)}', space=vmem, size = 0x12000, scoped, tag = 'internal scratch']
  %s0 = inlined_call_operand.hbm [shape: f32[16,32], index: 0, kind: input, shape index: {}]
  %s1 = inlined_call_operand.vmem [shape: f32[2,32], index: 1, kind: input, shape index: {}]
  %s2 = inlined_call_operand.hbm [shape: f32[16,32], index: 2, kind: output, shape index: {}]
  %s3 = sld [smem:[#allocation0]]
  $region22: #{tpu_custom_call.1} parent=0
    _
  %s5 = ssub.s32 1, %s3
  %s6 = scalar_select 0, %s5, %s3
  $region1: #{tpu_custom_call.1} parent=0
    #allocation2 [shape = 'u8[8192]{0}', space=vmem, size = 0x2000, scoped, tag = 'input window, operand 0, single buffered']
    #allocation3 [shape = 's32[1]{0}', space=sflag, size = 0x4, scoped, tag = 'scoped memory for tpu_custom_call.1']
    #allocation4 [shape = 's32[1]{0}', space=sflag, size = 0x4, scoped, tag = 'scoped memory for tpu_custom_call.1']
    #allocation5 [shape = 'u8[8192]{0}', space=vmem, size = 0x2000, scoped, tag = 'output window, operand 0, single buffered']
    %7 = vsyncpa [#allocation3], 0
    %8 = vsyncpa [#allocation4], 0
    // Predicated region
    $region2: #{tpu_custom_call.1} parent=1 // pred_check
      _
    $region3: #{tpu_custom_call.1} parent=1 // pred_check_branch
      %10 = sbr.rel (0) target = $region5
    $region4: #{tpu_custom_call.1} parent=1 // pred_region
      %s12 = ssub.s32 256, 256
      %13 = vsyncadd [#allocation3], %s12
      %s14 = sshll.u32 [#allocation2], 4
      %s15 = int_to_ptr.vmem [resolvable:$true] %s14
      %20 = dma.hbm_to_vmem [thread:$0]  %s0, 256, %s15, [#allocation3], 128, 128, 8
    $region5: #{tpu_custom_call.1} parent=1 // pred_fallthru
      _
    // Predicated region
    $region6: #{tpu_custom_call.1} parent=1 // pred_check
      _
    $region7: #{tpu_custom_call.1} parent=1 // pred_check_branch
      %22 = sbr.rel (0) target = $region9
    $region8: #{tpu_custom_call.1} parent=1 // pred_region
      _
    $region9: #{tpu_custom_call.1} parent=1 // pred_fallthru
      _
    // Predicated region
    $region10: #{tpu_custom_call.1} parent=1 // pred_check
      _
    $region11: #{tpu_custom_call.1} parent=1 // pred_check_branch
      %24 = sbr.rel (0) target = $region13
    $region12: #{tpu_custom_call.1} parent=1 // pred_region
      %25 = dma.done [#allocation3], 256
    $region13: #{tpu_custom_call.1} parent=1 // pred_fallthru
      _
    %v26 = vld [vmem:[#allocation2] sm:$0xff]
    %v27 = vld [vmem:[#allocation2 + $0x8] sm:$0xff]
    %vm28 = vcmask 261120
    %v29 = vsel %vm28, %v26, 0.0
    %30 = vadd.xlane.f32.xlu0 %v29
    %v31 = vpop.xlane.xlu0 %30
    %v32 = vsel %vm28, %v27, 0.0
    %33 = vadd.xlane.f32.xlu0 %v32
    %v34 = vpop.xlane.xlu0 %33
    %v35 = vmul.f32 %v26, %v26
    %v36 = vmul.f32 %v27, %v27
    %v37 = vsel %vm28, %v35, 0.0
    %38 = vadd.xlane.f32.xlu0 %v37
    %v39 = vpop.xlane.xlu0 %38
    %v40 = vsel %vm28, %v36, 0.0
    %41 = vadd.xlane.f32.xlu0 %v40
    %v42 = vpop.xlane.xlu0 %41
    %v43 = vmul.f32 %v31, 0.03125
    %v44 = vmul.f32 %v34, 0.03125
    %v45 = vmul.f32 %v39, 0.03125
    %v46 = vmul.f32 %v42, 0.03125
    %v47 = vmul.f32 %v43, %v43
    %v48 = vmul.f32 %v44, %v44
    %v49 = vsub.f32 %v45, %v47
    %v50 = vsub.f32 %v46, %v48
    %v51 = vmax.f32 %v49, 0.0
    %v52 = vmax.f32 %v50, 0.0
    %v53 = vsub.f32 %v26, %v43
    %v54 = vsub.f32 %v27, %v44
    %v55 = vadd.f32 %v51, 1e-12
    %v56 = vadd.f32 %v52, 1e-12
    %v57 = vrsqrt.pop %v55
    %v58 = vrsqrt.pop %v56
    %v59 = vmul.f32 %v53, %v57
    %v60 = vmul.f32 %v54, %v58
    %v61 = vld [vmem:[%s1] sm:$0x1]
    %v62 = vld [vmem:[%s1 + $0x1] sm:$0x1]
    %v63 = vlaneseq
    %v64 = vshrl.u32 %v63, 7
    %v65 = vsub.s32 0, %v64
    %v66 = vrot.slane %v61, %v65
    %v67 = vmul.f32 %v66, %v59
    %v68 = vmul.f32 %v66, %v60
    %v69 = vlaneseq
    %v70 = vshrl.u32 %v69, 7
    %v71 = vsub.s32 0, %v70
    %v72 = vrot.slane %v62, %v71
    %v73 = vadd.f32 %v67, %v72
    %v74 = vadd.f32 %v68, %v72
    %75 = vst.msk [vmem:[#allocation5] sm:$0xff] %vm28, %v73
    %76 = vst.msk [vmem:[#allocation5 + $0x8] sm:$0xff] %vm28, %v74
    // Predicated region
    $region14: #{tpu_custom_call.1} parent=1 // pred_check
      _
    $region15: #{tpu_custom_call.1} parent=1 // pred_check_branch
      %78 = sbr.rel (0) target = $region17
    $region16: #{tpu_custom_call.1} parent=1 // pred_region
      %s80 = ssub.s32 256, 256
      %81 = vsyncadd [#allocation4], %s80
      %s82 = sshll.u32 [#allocation5], 4
      %s83 = int_to_ptr.vmem [resolvable:$true] %s82
      %88 = dma.vmem_to_hbm [thread:$0]  %s83, 256, %s2, [#allocation4], 128, 128, 8
    $region17: #{tpu_custom_call.1} parent=1 // pred_fallthru
      _
    // Predicated region
    $region18: #{tpu_custom_call.1} parent=1 // pred_check
      _
    $region19: #{tpu_custom_call.1} parent=1 // pred_check_branch
      %90 = sbr.rel (0) target = $region21
    $region20: #{tpu_custom_call.1} parent=1 // pred_region
      %91 = dma.done [#allocation4], 256
    $region21: #{tpu_custom_call.1} parent=1 // pred_fallthru
      _
    %92 = vsyncpa [#allocation3], 1
    %93 = vsyncpa [#allocation4], 1

</llo_original>
